<compile_context>
chip_gen: v7x
topology: tpu7x:2x2x1
jax: 0.10.0
libtpu: 0.0.40
codegen_flags: <defaults>
</compile_context>

<pallas_src>
import functools

import jax
import jax.numpy as jnp
from jax.experimental import pallas as pl
from jax.experimental.pallas import tpu as pltpu


def _round_up(x: int, m: int) -> int:
    return ((x + m - 1) // m) * m


def _rsample_kernel(*refs, perturb: bool, true_b: int, tb: int, l_pad: int):
    """Fused rsample over one batch tile of TB rows.

    refs (perturb=True ): z_ref[TB,H], w_ref[H,2*Lp], b_ref[1,2*Lp], eps_ref[TB,Lp],
                          out_ref[TB,Lp], kl_ref[1,1](SMEM)
    refs (perturb=False): same without eps_ref.
    """
    if perturb:
        z_ref, w_ref, b_ref, eps_ref, out_ref, kl_ref = refs
    else:
        z_ref, w_ref, b_ref, out_ref, kl_ref = refs
        eps_ref = None

    i = pl.program_id(0)
    nb = pl.num_programs(0)

    @pl.when(i == 0)
    def _init():
        kl_ref[0, 0] = 0.0

    # Single fused matmul: [TB, H] @ [H, 2*L_pad]  (mean half | var half).
    fused = (jnp.dot(z_ref[...], w_ref[...], preferred_element_type=jnp.float32)
             + b_ref[...])
    z_mean = fused[:, :l_pad]
    z_log_var = -jnp.abs(fused[:, l_pad:])

    if perturb:
        half_exp = jnp.exp(0.5 * z_log_var)          # one EUP exp per element
        exp_log_var = half_exp * half_exp            # exp(log_var) via VALU mul
        out_ref[...] = z_mean + half_exp * eps_ref[...]
    else:
        exp_log_var = jnp.exp(z_log_var)
        out_ref[...] = z_mean

    # KL partial sum for this tile.  Padded lane columns contribute 0 by
    # construction; padded batch rows are masked out explicitly.
    row = jax.lax.broadcasted_iota(jnp.int32, (tb, 1), 0) + i * tb
    valid = (row < true_b).astype(jnp.float32)
    term = (1.0 + z_log_var - z_mean * z_mean - exp_log_var) * valid
    kl_ref[0, 0] += jnp.sum(term)

    @pl.when(i == nb - 1)
    def _finalize():
        kl_ref[0, 0] = kl_ref[0, 0] * (-0.5 / true_b)


def prepare_rsample_params(w_mean, b_mean, w_var, b_var):
    """One-time parameter prep: transpose, fuse mean|var, pad lanes to 128.

    w_mean / w_var: [L, H] (PyTorch nn.Linear layout).  Returns
    (fused_w [H, 2*L_pad], fused_b [1, 2*L_pad], L, L_pad)."""
    L, H = w_mean.shape
    l_pad = _round_up(max(L, 128), 128)
    fused_w = jnp.zeros((H, 2 * l_pad), jnp.float32)
    fused_w = fused_w.at[:, :L].set(jnp.transpose(w_mean).astype(jnp.float32))
    fused_w = fused_w.at[:, l_pad:l_pad + L].set(jnp.transpose(w_var).astype(jnp.float32))
    fused_b = jnp.zeros((1, 2 * l_pad), jnp.float32)
    fused_b = fused_b.at[0, :L].set(b_mean.astype(jnp.float32))
    fused_b = fused_b.at[0, l_pad:l_pad + L].set(b_var.astype(jnp.float32))
    return fused_w, fused_b, L, l_pad


def rsample_pallas(z_vecs, fused_w, fused_b, latent_size, epsilon=None,
                   *, perturb=True, tb=None):
    """z_vecs: [B, H] f32. fused_w/fused_b from prepare_rsample_params.
    epsilon: [B, latent_size] standard-normal noise (required iff perturb).
    Returns (z [B, latent_size], kl scalar)."""
    B, H = z_vecs.shape
    l_pad = fused_w.shape[1] // 2

    # Batch tile: multiple of 8 sublanes, capped so double-buffered tiles stay
    # small even under v7x's 64 MiB VMEM.
    if tb is None:
        tb = min(256, _round_up(B, 8))
    b_pad = _round_up(B, tb)
    nb = b_pad // tb

    z_p = z_vecs if b_pad == B else jnp.pad(z_vecs, ((0, b_pad - B), (0, 0)))

    in_arrays = [z_p, fused_w, fused_b]
    in_specs = [
        pl.BlockSpec((tb, H), lambda i: (i, 0)),            # z tile
        pl.BlockSpec((H, 2 * l_pad), lambda i: (0, 0)),     # fused weight (resident)
        pl.BlockSpec((1, 2 * l_pad), lambda i: (0, 0)),     # fused bias (resident)
    ]
    if perturb:
        eps_p = jnp.pad(epsilon.astype(jnp.float32),
                        ((0, b_pad - B), (0, l_pad - latent_size)))
        in_arrays.append(eps_p)
        in_specs.append(pl.BlockSpec((tb, l_pad), lambda i: (i, 0)))

    kernel = functools.partial(_rsample_kernel, perturb=perturb,
                               true_b=B, tb=tb, l_pad=l_pad)

    out, kl = pl.pallas_call(
        kernel,
        grid=(nb,),
        in_specs=in_specs,
        out_specs=[
            pl.BlockSpec((tb, l_pad), lambda i: (i, 0)),            # lane-dense z
            pl.BlockSpec(memory_space=pltpu.MemorySpace.SMEM),      # scalar KL
        ],
        out_shape=[
            jax.ShapeDtypeStruct((b_pad, l_pad), jnp.float32),
            jax.ShapeDtypeStruct((1, 1), jnp.float32),
        ],
        compiler_params=pltpu.CompilerParams(
            # KL is accumulated across batch tiles -> reduction axis.
            dimension_semantics=("arbitrary",),
            vmem_limit_bytes=32 << 20,
        ),
    )(*in_arrays)

    return out[:B, :latent_size], kl[0, 0]


def hiervae_forward(root_vecs, fused_w, fused_b, latent_size, epsilon, beta,
                    perturb_z=True):
    """HierVAE-level forward: rsample on encoder root vectors + KL term.

    Returns (root_vecs_latent, kl_div, beta * kl_div).  The decoder loss term is
    out of scope (decoder code not provided)."""
    z, kl = rsample_pallas(root_vecs, fused_w, fused_b, latent_size,
                           epsilon, perturb=perturb_z)
    return z, kl, beta * kl


def _torch_linear_init(key, out_features, in_features):
    # PyTorch nn.Linear default init: U(-1/sqrt(in), 1/sqrt(in)) for W and b.
    kw, kb = jax.random.split(key)
    bound = 1.0 / jnp.sqrt(jnp.float32(in_features))
    w = jax.random.uniform(kw, (out_features, in_features), jnp.float32,
                           minval=-bound, maxval=bound)
    b = jax.random.uniform(kb, (out_features,), jnp.float32,
                           minval=-bound, maxval=bound)
    return w, b


def _reference_rsample(z, wm, bm, wv, bv, eps, perturb=True):
    z_mean = z @ wm.T + bm
    z_log_var = -jnp.abs(z @ wv.T + bv)
    kl = -0.5 * jnp.sum(1.0 + z_log_var - z_mean * z_mean
                        - jnp.exp(z_log_var)) / z.shape[0]
    out = z_mean + jnp.exp(z_log_var / 2) * eps if perturb else z_mean
    return out, kl


if __name__ == "__main__":
    # Small, module-consistent shapes: hidden_size=32, latent_size=32, batch=8.
    B, HIDDEN, LATENT = 8, 32, 32

    key = jax.random.PRNGKey(0)
    k_z, k_eps, k_mean, k_var = jax.random.split(key, 4)

    # Stand-in for encoder output root_vecs [B, hidden_size].
    root_vecs = jax.random.normal(k_z, (B, HIDDEN), jnp.float32)
    epsilon = jax.random.normal(k_eps, (B, LATENT), jnp.float32)

    rm_w, rm_b = _torch_linear_init(k_mean, LATENT, HIDDEN)
    rv_w, rv_b = _torch_linear_init(k_var, LATENT, HIDDEN)

    # One-time parameter prep (transpose + fuse + lane-pad).
    fused_w, fused_b, lat, _ = prepare_rsample_params(rm_w, rm_b, rv_w, rv_b)

    beta = 0.1

    # Training path (perturb=True).
    z_out, kl_div, beta_kl = hiervae_forward(root_vecs, fused_w, fused_b, lat,
                                             epsilon, beta, perturb_z=True)
    # Reconstruction path (perturb=False, no epsilon DMA).
    z_det, kl_det = rsample_pallas(root_vecs, fused_w, fused_b, lat,
                                   perturb=False)
    jax.block_until_ready((z_out, kl_div, beta_kl, z_det, kl_det))

    # Sanity checks vs. pure-JAX reference of the PyTorch math.
    z_ref, kl_ref = _reference_rsample(root_vecs, rm_w, rm_b, rv_w, rv_b,
                                       epsilon, perturb=True)
    zd_ref, kld_ref = _reference_rsample(root_vecs, rm_w, rm_b, rv_w, rv_b,
                                         epsilon, perturb=False)
    assert jnp.allclose(z_out, z_ref, atol=1e-5, rtol=1e-5)
    assert jnp.allclose(kl_div, kl_ref, atol=1e-5, rtol=1e-5)
    assert jnp.allclose(z_det, zd_ref, atol=1e-5, rtol=1e-5)
    assert jnp.allclose(kl_det, kld_ref, atol=1e-5, rtol=1e-5)

    print("KERNEL_OK")
</pallas_src>

<mosaic_0001>
module attributes {stable_mosaic.version = 11 : i64} {
  func.func @_rsample_kernel(%arg0: i32, %arg1: memref<8x32xf32, #tpu.memory_space<vmem>>, %arg2: memref<32x256xf32, #tpu.memory_space<vmem>>, %arg3: memref<1x256xf32, #tpu.memory_space<vmem>>, %arg4: memref<8x128xf32, #tpu.memory_space<vmem>>, %arg5: memref<8x128xf32, #tpu.memory_space<vmem>>, %arg6: memref<1x1xf32, #tpu.memory_space<smem>>) attributes {dimension_semantics = [#tpu.dimension_semantics<arbitrary>], iteration_bounds = array<i64: 1>, scalar_prefetch = 0 : i64, scratch_operands = 0 : i64, tpu.core_type = #tpu.core_type<tc>, window_params = [{transform_indices = @transform_0, window_bounds = array<i64: 8, 32>}, {pipeline_mode = #tpu.pipeline_mode<synchronous>, transform_indices = @transform_1, window_bounds = array<i64: 32, 256>}, {pipeline_mode = #tpu.pipeline_mode<synchronous>, transform_indices = @transform_2, window_bounds = array<i64: 1, 256>}, {transform_indices = @transform_3, window_bounds = array<i64: 8, 128>}, {transform_indices = @transform_4, window_bounds = array<i64: 8, 128>}, {transform_indices = @transform_5, window_bounds = array<i64: 1, 1>}]} {
    %c0_i32 = arith.constant 0 : i32
    %0 = arith.cmpi eq, %arg0, %c0_i32 : i32
    %1 = arith.extui %0 : i1 to i32
    %c0_i32_0 = arith.constant 0 : i32
    %2 = arith.cmpi ne, %1, %c0_i32_0 : i32
    scf.if %2 {
      %cst_21 = arith.constant 0.000000e+00 : f32
      %c0_22 = arith.constant 0 : index
      %c0_23 = arith.constant 0 : index
      %47 = memref.load %arg6[%c0_22, %c0_23] : memref<1x1xf32, #tpu.memory_space<smem>>
      memref.store %cst_21, %arg6[%c0_22, %c0_23] : memref<1x1xf32, #tpu.memory_space<smem>>
    } else {
    }
    %c0 = arith.constant 0 : index
    %c0_1 = arith.constant 0 : index
    %3 = vector.load %arg1[%c0, %c0_1] : memref<8x32xf32, #tpu.memory_space<vmem>>, vector<8x32xf32>
    %c0_2 = arith.constant 0 : index
    %c0_3 = arith.constant 0 : index
    %4 = vector.load %arg2[%c0_2, %c0_3] : memref<32x256xf32, #tpu.memory_space<vmem>>, vector<32x256xf32>
    %cst = arith.constant dense<0.000000e+00> : vector<8x256xf32>
    %5 = tpu.matmul %3, %4, %cst {dimension_numbers = #tpu.dot_dimension_numbers<[1], [0], [0], [1], [0, 0, 1, 1], [], []>} : vector<8x32xf32>, vector<32x256xf32>, vector<8x256xf32> -> vector<8x256xf32>
    %c0_4 = arith.constant 0 : index
    %c0_5 = arith.constant 0 : index
    %6 = vector.load %arg3[%c0_4, %c0_5] : memref<1x256xf32, #tpu.memory_space<vmem>>, vector<1x256xf32>
    %7 = vector.broadcast %6 : vector<1x256xf32> to vector<8x256xf32>
    %8 = arith.addf %5, %7 : vector<8x256xf32>
    %9 = vector.extract_strided_slice %8 {offsets = [0, 0], sizes = [8, 128], strides = [1, 1]} : vector<8x256xf32> to vector<8x128xf32>
    %10 = vector.extract_strided_slice %8 {offsets = [0, 128], sizes = [8, 128], strides = [1, 1]} : vector<8x256xf32> to vector<8x128xf32>
    %11 = math.absf %10 : vector<8x128xf32>
    %cst_6 = arith.constant 0.000000e+00 : f32
    %12 = vector.broadcast %cst_6 : f32 to vector<8x128xf32>
    %13 = arith.subf %12, %11 : vector<8x128xf32>
    %cst_7 = arith.constant 5.000000e-01 : f32
    %14 = vector.broadcast %cst_7 : f32 to vector<8x128xf32>
    %15 = arith.mulf %14, %13 : vector<8x128xf32>
    %16 = math.exp %15 : vector<8x128xf32>
    %17 = arith.mulf %16, %16 : vector<8x128xf32>
    %c0_8 = arith.constant 0 : index
    %c0_9 = arith.constant 0 : index
    %18 = vector.load %arg4[%c0_8, %c0_9] : memref<8x128xf32, #tpu.memory_space<vmem>>, vector<8x128xf32>
    %19 = arith.mulf %16, %18 : vector<8x128xf32>
    %20 = arith.addf %9, %19 : vector<8x128xf32>
    %c0_10 = arith.constant 0 : index
    %c0_11 = arith.constant 0 : index
    %21 = vector.load %arg5[%c0_10, %c0_11] : memref<8x128xf32, #tpu.memory_space<vmem>>, vector<8x128xf32>
    tpu.vector_store %arg5[%c0_10, %c0_11], %20 {strides = array<i32>} : memref<8x128xf32, #tpu.memory_space<vmem>>, vector<8x128xf32>,
    %22 = tpu.iota {dimensions = array<i32: 0>} : vector<8x1xi32>
    %c8_i32 = arith.constant 8 : i32
    %23 = arith.muli %arg0, %c8_i32 : i32
    %24 = vector.broadcast %23 : i32 to vector<8x1xi32>
    %25 = arith.addi %22, %24 : vector<8x1xi32>
    %c8_i32_12 = arith.constant 8 : i32
    %26 = vector.broadcast %c8_i32_12 : i32 to vector<8x1xi32>
    %27 = arith.cmpi slt, %25, %26 : vector<8x1xi32>
    %28 = arith.extui %27 : vector<8x1xi1> to vector<8x1xi32>
    %29 = arith.sitofp %28 : vector<8x1xi32> to vector<8x1xf32>
    %cst_13 = arith.constant 1.000000e+00 : f32
    %30 = vector.broadcast %cst_13 : f32 to vector<8x128xf32>
    %31 = arith.addf %30, %13 : vector<8x128xf32>
    %32 = arith.mulf %9, %9 : vector<8x128xf32>
    %33 = arith.subf %31, %32 : vector<8x128xf32>
    %34 = arith.subf %33, %17 : vector<8x128xf32>
    %35 = vector.broadcast %29 : vector<8x1xf32> to vector<8x128xf32>
    %36 = arith.mulf %34, %35 : vector<8x128xf32>
    %c0_14 = arith.constant 0 : index
    %c0_15 = arith.constant 0 : index
    %37 = memref.load %arg6[%c0_14, %c0_15] : memref<1x1xf32, #tpu.memory_space<smem>>
    %38 = vector.shape_cast %36 : vector<8x128xf32> to vector<1x8x128xf32>
    %cst_16 = arith.constant dense<0.000000e+00> : vector<1xf32>
    %39 = vector.multi_reduction <add>, %38, %cst_16 [1, 2] : vector<1x8x128xf32> to vector<1xf32>
    %40 = vector.shape_cast %39 : vector<1xf32> to vector<1x1x1xf32>
    %41 = vector.extract %40[0, 0, 0] : f32 from vector<1x1x1xf32>
    %42 = arith.addf %37, %41 : f32
    %c0_17 = arith.constant 0 : index
    %c0_18 = arith.constant 0 : index
    %43 = memref.load %arg6[%c0_17, %c0_18] : memref<1x1xf32, #tpu.memory_space<smem>>
    memref.store %42, %arg6[%c0_17, %c0_18] : memref<1x1xf32, #tpu.memory_space<smem>>
    %c0_i32_19 = arith.constant 0 : i32
    %44 = arith.cmpi eq, %arg0, %c0_i32_19 : i32
    %45 = arith.extui %44 : i1 to i32
    %c0_i32_20 = arith.constant 0 : i32
    %46 = arith.cmpi ne, %45, %c0_i32_20 : i32
    scf.if %46 {
      %c0_21 = arith.constant 0 : index
      %c0_22 = arith.constant 0 : index
      %47 = memref.load %arg6[%c0_21, %c0_22] : memref<1x1xf32, #tpu.memory_space<smem>>
      %cst_23 = arith.constant -6.250000e-02 : f32
      %48 = arith.mulf %47, %cst_23 : f32
      %c0_24 = arith.constant 0 : index
      %c0_25 = arith.constant 0 : index
      %49 = memref.load %arg6[%c0_24, %c0_25] : memref<1x1xf32, #tpu.memory_space<smem>>
      memref.store %48, %arg6[%c0_24, %c0_25] : memref<1x1xf32, #tpu.memory_space<smem>>
    } else {
    }
    return
  }
  func.func @transform_0(%arg0: i32) -> (i32, i32) {
    %c0_i32 = arith.constant 0 : i32
    %c0_i32_0 = arith.constant 0 : i32
    return %arg0, %c0_i32 : i32, i32
  }
  func.func @transform_1(%arg0: i32) -> (i32, i32) {
    %c0_i32 = arith.constant 0 : i32
    %c0_i32_0 = arith.constant 0 : i32
    %c0_i32_1 = arith.constant 0 : i32
    return %c0_i32, %c0_i32_0 : i32, i32
  }
  func.func @transform_2(%arg0: i32) -> (i32, i32) {
    %c0_i32 = arith.constant 0 : i32
    %c0_i32_0 = arith.constant 0 : i32
    %c0_i32_1 = arith.constant 0 : i32
    return %c0_i32, %c0_i32_0 : i32, i32
  }
  func.func @transform_3(%arg0: i32) -> (i32, i32) {
    %c0_i32 = arith.constant 0 : i32
    %c0_i32_0 = arith.constant 0 : i32
    return %arg0, %c0_i32 : i32, i32
  }
  func.func @transform_4(%arg0: i32) -> (i32, i32) {
    %c0_i32 = arith.constant 0 : i32
    %c0_i32_0 = arith.constant 0 : i32
    return %arg0, %c0_i32 : i32, i32
  }
  func.func @transform_5(%arg0: i32) -> (i32, i32) {
    %c0_i32 = arith.constant 0 : i32
    %c0_i32_0 = arith.constant 0 : i32
    %c0_i32_1 = arith.constant 0 : i32
    return %c0_i32, %c0_i32_0 : i32, i32
  }
}

</mosaic_0001>

<llo_original>
// kernel: tpu_custom_call.1
$region0: #{tpu_custom_call.1}
  #allocation0 [shape = 'u32[]', space=smem, size = 0x4, offset = 0x4, fixed_abs, tag = 'smem constant byte address 0x4 - core index']
  #allocation1 [shape = 'u32[144,128]{1,0:T(1,128)}', space=vmem, size = 0x12000, scoped, tag = 'internal scratch']
  %s0 = inlined_call_operand.hbm [shape: f32[8,32], index: 0, kind: input, shape index: {}]
  %s1 = inlined_call_operand.hbm [shape: f32[32,256], index: 1, kind: input, shape index: {}]
  %s2 = inlined_call_operand.vmem [shape: f32[1,256], index: 2, kind: input, shape index: {}]
  %s3 = inlined_call_operand.vmem [shape: f32[8,128], index: 3, kind: input, shape index: {}]
  %s4 = inlined_call_operand.hbm [shape: f32[8,128], index: 4, kind: output, shape index: {0}]
  %s5 = inlined_call_operand.hbm [shape: f32[1,1], index: 5, kind: output, shape index: {1}]
  %6 = xla_tuple %s4, %s5
  %s7 = sld [smem:[#allocation0]]
  $region50: #{tpu_custom_call.1} parent=0
    _
  %s9 = ssub.s32 1, %s7
  %s10 = scalar_select 0, %s9, %s7
  $region1: #{tpu_custom_call.1} parent=0
    #allocation2 [shape = 'u8[4096]{0}', space=vmem, size = 0x1000, scoped, tag = 'input window, operand 0, single buffered']
    #allocation3 [shape = 's32[1]{0}', space=sflag, size = 0x4, scoped, tag = 'scoped memory for tpu_custom_call.1']
    #allocation4 [shape = 's32[1]{0}', space=sflag, size = 0x4, scoped, tag = 'scoped memory for tpu_custom_call.1']
    #allocation5 [shape = 's32[1]{0}', space=sflag, size = 0x4, scoped, tag = 'scoped memory for tpu_custom_call.1']
    #allocation6 [shape = 'u8[32768]{0}', space=vmem, size = 0x8000, scoped, tag = 'input window, operand 1, single buffered']
    #allocation7 [shape = 's32[1]{0}', space=sflag, size = 0x4, scoped, tag = 'scoped memory for tpu_custom_call.1']
    #allocation8 [shape = 'u8[4096]{0}', space=vmem, size = 0x1000, scoped, tag = 'output window, operand 0, single buffered']
    #allocation9 [shape = 'u8[512]{0}', space=smem, size = 0x200, scoped, tag = 'output window, operand 1, single buffered']
    %11 = vsyncpa [#allocation3], 0
    %12 = vsyncpa [#allocation7], 0
    %13 = vsyncpa [#allocation4], 0
    %14 = vsyncpa [#allocation5], 0
    // Predicated region
    $region2: #{tpu_custom_call.1} parent=1 // pred_check
      _
    $region3: #{tpu_custom_call.1} parent=1 // pred_check_branch
      %16 = sbr.rel (0) target = $region5
    $region4: #{tpu_custom_call.1} parent=1 // pred_region
      %s18 = ssub.s32 128, 128
      %19 = vsyncadd [#allocation3], %s18
      %s21 = sshll.u32 [#allocation2], 4
      %s22 = int_to_ptr.vmem [resolvable:$true] %s21
      %24 = dma.hbm_to_vmem [thread:$0]  %s0, 128, %s22, [#allocation3]
    $region5: #{tpu_custom_call.1} parent=1 // pred_fallthru
      _
    // Predicated region
    $region6: #{tpu_custom_call.1} parent=1 // pred_check
      _
    $region7: #{tpu_custom_call.1} parent=1 // pred_check_branch
      %26 = sbr.rel (0) target = $region9
    $region8: #{tpu_custom_call.1} parent=1 // pred_region
      %s28 = ssub.s32 1024, 1024
      %29 = vsyncadd [#allocation7], %s28
      %s30 = sshll.u32 [#allocation6], 4
      %s31 = int_to_ptr.vmem [resolvable:$true] %s30
      %36 = dma.hbm_to_vmem [thread:$0]  %s1, 1024, %s31, [#allocation7], 256, 256, 16
    $region9: #{tpu_custom_call.1} parent=1 // pred_fallthru
      _
    // Predicated region
    $region10: #{tpu_custom_call.1} parent=1 // pred_check
      _
    $region11: #{tpu_custom_call.1} parent=1 // pred_check_branch
      %38 = sbr.rel (0) target = $region13
    $region12: #{tpu_custom_call.1} parent=1 // pred_region
      _
    $region13: #{tpu_custom_call.1} parent=1 // pred_fallthru
      _
    // Predicated region
    $region14: #{tpu_custom_call.1} parent=1 // pred_check
      _
    $region15: #{tpu_custom_call.1} parent=1 // pred_check_branch
      %40 = sbr.rel (0) target = $region17
    $region16: #{tpu_custom_call.1} parent=1 // pred_region
      _
    $region17: #{tpu_custom_call.1} parent=1 // pred_fallthru
      _
    // Predicated region
    $region18: #{tpu_custom_call.1} parent=1 // pred_check
      _
    $region19: #{tpu_custom_call.1} parent=1 // pred_check_branch
      %42 = sbr.rel (0) target = $region21
    $region20: #{tpu_custom_call.1} parent=1 // pred_region
      %43 = dma.done [#allocation3], 128
    $region21: #{tpu_custom_call.1} parent=1 // pred_fallthru
      _
    // Predicated region
    $region22: #{tpu_custom_call.1} parent=1 // pred_check
      _
    $region23: #{tpu_custom_call.1} parent=1 // pred_check_branch
      %45 = sbr.rel (0) target = $region25
    $region24: #{tpu_custom_call.1} parent=1 // pred_region
      %46 = dma.done [#allocation7], 1024
    $region25: #{tpu_custom_call.1} parent=1 // pred_fallthru
      _
    %p47 = scmp.eq.s32.totalorder 0, 0
    // Predicated region
    $region26: #{tpu_custom_call.1} parent=1 // pred_check
      %p48 = pneg %p47
    $region27: #{tpu_custom_call.1} parent=1 // pred_check_branch
      %50 = sbr.rel (%p48) target = $region29
    $region28: #{tpu_custom_call.1} parent=1 // pred_region
      %s51 = scalar_lea.smem [#allocation9], 0
      %52 = sst [smem:[%s51]] 0.0
    $region29: #{tpu_custom_call.1} parent=1 // pred_fallthru
      _
    %v53 = vld [vmem:[#allocation2] sm:$0xff]
    %v54 = vld [vmem:[#allocation6] sm:$0xff]
    %v55 = vld [vmem:[#allocation6 + $0x8] sm:$0xff]
    %v56 = vld [vmem:[#allocation6 + $0x10] sm:$0xff]
    %v57 = vld [vmem:[#allocation6 + $0x18] sm:$0xff]
    %v58 = vld [vmem:[#allocation6 + $0x20] sm:$0xff]
    %v59 = vld [vmem:[#allocation6 + $0x28] sm:$0xff]
    %v60 = vld [vmem:[#allocation6 + $0x30] sm:$0xff]
    %v61 = vld [vmem:[#allocation6 + $0x38] sm:$0xff]
    %v62 = vld [vmem:[%s2] sm:$0x3]
    %v64 = vlaneseq
    %v65 = vshrl.u32 %v64, 7
    %v66 = vsub.s32 0, %v65
    %v67 = vrot.slane %v62, %v66
    %v68 = vlaneseq
    %v69 = vshrl.u32 %v68, 7
    %v70 = vsub.s32 1, %v69
    %v71 = vrot.slane %v62, %v70
    %vm74 = vcmask 261120
    %v76 = vsel %vm74, %v53, 0
    %78 = vmatprep.subr.mxu0 %v55
    %79 = vmatpush1.msra.mxu0 %v54
    %80 = vmatprep.subr.mxu0 %v57
    %81 = vmatpush1.msra.mxu0 %v56
    %82 = vmatprep.subr.mxu0 %v59
    %83 = vmatpush1.msra.mxu0 %v58
    %84 = vmatprep.subr.mxu0 %v61
    %85 = vmatpush1.msra.mxu0 %v60
    %86 = vmatprep.subr.mxu0 0.0
    %87 = vmatpush1.msra.mxu0 0.0
    %88 = vmatprep.subr.mxu0 0.0
    %89 = vmatpush1.msra.mxu0 0.0
    %90 = vmatprep.subr.mxu0 0.0
    %91 = vmatpush1.msra.mxu0 0.0
    %92 = vmatprep.subr.mxu0 0.0
    %93 = vmatpush1.msra.mxu0 0.0
    %94 = vmatprep.subr.mxu0 0.0
    %95 = vmatpush1.msra.mxu0 0.0
    %96 = vmatprep.subr.mxu0 0.0
    %97 = vmatpush1.msra.mxu0 0.0
    %98 = vmatprep.subr.mxu0 0.0
    %99 = vmatpush1.msra.mxu0 0.0
    %100 = vmatprep.subr.mxu0 0.0
    %101 = vmatpush1.msra.mxu0 0.0
    %102 = vmatprep.subr.mxu0 0.0
    %103 = vmatpush1.msra.mxu0 0.0
    %104 = vmatprep.subr.mxu0 0.0
    %105 = vmatpush1.msra.mxu0 0.0
    %106 = vmatprep.subr.mxu0 0.0
    %107 = vmatpush1.msra.mxu0 0.0
    %108 = vmatprep.subr.mxu0 0.0
    %109 = vmatpush1.msra.mxu0 0.0
    %110 = vmatprep.subr.mxu0 0.0
    %111 = vmatpush1.msra.mxu0 0.0
    %112 = vmatprep.subr.mxu0 0.0
    %113 = vmatpush1.msra.mxu0 0.0
    %114 = vmatprep.subr.mxu0 0.0
    %115 = vmatpush1.msra.mxu0 0.0
    %116 = vmatprep.subr.mxu0 0.0
    %117 = vmatpush1.msra.mxu0 0.0
    %118 = vmatprep.subr.mxu0 0.0
    %119 = vmatpush1.msra.mxu0 0.0
    %120 = vmatprep.subr.mxu0 0.0
    %121 = vmatpush1.msra.mxu0 0.0
    %122 = vmatprep.subr.mxu0 0.0
    %123 = vmatpush1.msra.mxu0 0.0
    %124 = vmatprep.subr.mxu0 0.0
    %125 = vmatpush1.msra.mxu0 0.0
    %126 = vmatprep.subr.mxu0 0.0
    %127 = vmatpush1.msra.mxu0 0.0
    %128 = vmatprep.subr.mxu0 0.0
    %129 = vmatpush1.msra.mxu0 0.0
    %130 = vmatprep.subr.mxu0 0.0
    %131 = vmatpush1.msra.mxu0 0.0
    %132 = vmatprep.subr.mxu0 0.0
    %133 = vmatpush1.msra.mxu0 0.0
    %134 = vmatprep.subr.mxu0 0.0
    %135 = vmatpush1.msra.mxu0 0.0
    %136 = vmatprep.subr.mxu0 0.0
    %137 = vmatpush1.msra.mxu0 0.0
    %138 = vmatprep.subr.mxu0 0.0
    %139 = vmatpush1.msra.mxu0 0.0
    %140 = vmatprep.subr.mxu0 0.0
    %141 = vmatpush1.msra.mxu0 0.0
    %142 = vmatprep.mubr.f32.mxu0 0.0
    %143 = vmatmul.mubr.f32.gmra.mrb[0].mxu0 %v76
    %v144 = vpop.f32.mrb[0].mxu0
    %v145 = vadd.f32 %v67, %v144
    %v146 = vpop.f32.mrb[0].mxu0
    %v147 = vadd.f32 %v71, %v146
    %148 = vdwg.mxu0
    %v149 = vand.u32 2147483647, %v147
    %v150 = vsub.f32 0.0, %v149
    %v151 = vmul.f32 %v150, 0.5
    %v152 = vmul.f32 %v151, 1.442695
    %v153 = vpow.pop %v152
    %v154 = vmul.f32 %v153, %v153
    %v155 = vld [vmem:[%s3] sm:$0xff]
    %v156 = vmul.f32 %v153, %v155
    %v157 = vadd.f32 %v145, %v156
    %158 = vst [vmem:[#allocation8] sm:$0xff] %v157
    %v159 = vlaneseq
    %v160 = vshrl.u32 %v159, 7
    %s161 = smul.u32 0, 8
    %v162 = vstv %s161
    %v163 = vadd.s32 %v160, %v162
    %vm164 = vcmp.lt.s32.totalorder %v163, 8
    %v165 = vsel %vm164, 1, 0
    %v166 = vcvt.s32.f32 %v165
    %v167 = vadd.f32 %v150, 1.0
    %v168 = vmul.f32 %v145, %v145
    %v169 = vsub.f32 %v167, %v168
    %v170 = vsub.f32 %v169, %v154
    %v171 = vmul.f32 %v170, %v166
    %s172 = sld [smem:[#allocation9]]
    %173 = vadd.xlane.f32.xlu0 %v171
    %v174 = vpop.xlane.xlu0 %173
    %v175 = vrot.slane %v174, 4
    %v176 = vadd.f32 %v174, %v175
    %v177 = vrot.slane %v176, 2
    %v178 = vadd.f32 %v176, %v177
    %v179 = vrot.slane %v178, 1
    %v180 = vadd.f32 %v178, %v179
    %s181 = vtos %v180
    %s182 = sadd.f32 %s172, %s181
    %s183 = scalar_lea.smem [#allocation9], 0
    %184 = sst [smem:[%s183]] %s182
    // Predicated region
    $region30: #{tpu_custom_call.1} parent=1 // pred_check
      %p185 = pneg %p47
    $region31: #{tpu_custom_call.1} parent=1 // pred_check_branch
      %187 = sbr.rel (%p185) target = $region33
    $region32: #{tpu_custom_call.1} parent=1 // pred_region
      %s188 = sld [smem:[#allocation9]]
      %s189 = smul.f32 %s188, -0.0625
      %190 = sst [smem:[%s183]] %s189
    $region33: #{tpu_custom_call.1} parent=1 // pred_fallthru
      _
    // Predicated region
    $region34: #{tpu_custom_call.1} parent=1 // pred_check
      _
    $region35: #{tpu_custom_call.1} parent=1 // pred_check_branch
      %192 = sbr.rel (0) target = $region37
    $region36: #{tpu_custom_call.1} parent=1 // pred_region
      %s194 = ssub.s32 128, 128
      %195 = vsyncadd [#allocation4], %s194
      %s197 = sshll.u32 [#allocation8], 4
      %s198 = int_to_ptr.vmem [resolvable:$true] %s197
      %200 = dma.vmem_to_hbm [thread:$0]  %s198, 128, %s4, [#allocation4]
    $region37: #{tpu_custom_call.1} parent=1 // pred_fallthru
      _
    // Predicated region
    $region38: #{tpu_custom_call.1} parent=1 // pred_check
      _
    $region39: #{tpu_custom_call.1} parent=1 // pred_check_branch
      %202 = sbr.rel (0) target = $region41
    $region40: #{tpu_custom_call.1} parent=1 // pred_region
      %s204 = ssub.s32 16, 16
      %205 = vsyncadd [#allocation5], %s204
      %208 = dma.smem_to_hbm [#allocation9], 16, %s5, [#allocation5]
    $region41: #{tpu_custom_call.1} parent=1 // pred_fallthru
      _
    // Predicated region
    $region42: #{tpu_custom_call.1} parent=1 // pred_check
      _
    $region43: #{tpu_custom_call.1} parent=1 // pred_check_branch
      %210 = sbr.rel (0) target = $region45
    $region44: #{tpu_custom_call.1} parent=1 // pred_region
      %211 = dma.done [#allocation4], 128
    $region45: #{tpu_custom_call.1} parent=1 // pred_fallthru
      _
    // Predicated region
    $region46: #{tpu_custom_call.1} parent=1 // pred_check
      _
    $region47: #{tpu_custom_call.1} parent=1 // pred_check_branch
      %213 = sbr.rel (0) target = $region49
    $region48: #{tpu_custom_call.1} parent=1 // pred_region
      %214 = dma.done [#allocation5], 16
    $region49: #{tpu_custom_call.1} parent=1 // pred_fallthru
      _
    %215 = sfence
    %216 = vsyncpa [#allocation3], 1
    %217 = vsyncpa [#allocation7], 1
    %218 = vsyncpa [#allocation4], 1
    %219 = vsyncpa [#allocation5], 1

</llo_original>
